<compile_context>
chip_gen: v5e
topology: v5e:2x2
jax: 0.10.0
libtpu: 0.0.40
codegen_flags: <defaults>
</compile_context>

<pallas_src>
import functools

import jax
import jax.numpy as jnp
import numpy as np
from jax.experimental import pallas as pl
from jax.experimental.pallas import tpu as pltpu


def _round_up(x, m):
    return ((x + m - 1) // m) * m


# ----------------------------------------------------------------------------
# Pallas kernel: 2-hidden-layer Tanh MLP with the context term pre-folded into
# a per-batch bias for the first layer.
# ----------------------------------------------------------------------------
def _mlp_kernel(xw_ref, ctx_ref, w1a_ref, w2_ref, b2_ref, w3_ref, b3_ref, out_ref):
    # xw_ref: (tile, E)   ctx_ref: (1, H) per-batch (context @ W1b + b1)
    h1 = jnp.tanh(
        jnp.dot(xw_ref[...], w1a_ref[...], preferred_element_type=jnp.float32)
        + ctx_ref[...]
    )
    h2 = jnp.tanh(
        jnp.dot(h1, w2_ref[...], preferred_element_type=jnp.float32) + b2_ref[...]
    )
    out = jnp.dot(h2, w3_ref[...], preferred_element_type=jnp.float32) + b3_ref[...]
    out_ref[...] = out.astype(out_ref.dtype)


# ----------------------------------------------------------------------------
# Parameter init (mimics nn.Linear default U(-1/sqrt(fan_in), 1/sqrt(fan_in))).
# Weights are stored as [in_features, out_features].
# ----------------------------------------------------------------------------
def init_kernel_var_params(key, embd_dim, hidden_dim, kernel_dim):
    dims = [(2 * embd_dim, hidden_dim), (hidden_dim, hidden_dim), (hidden_dim, kernel_dim)]
    params = []
    for (fan_in, fan_out) in dims:
        key, kw, kb = jax.random.split(key, 3)
        bound = 1.0 / np.sqrt(fan_in)
        w = jax.random.uniform(kw, (fan_in, fan_out), jnp.float32, -bound, bound)
        b = jax.random.uniform(kb, (1, fan_out), jnp.float32, -bound, bound)
        params.extend([w, b])
    return tuple(params)


# ----------------------------------------------------------------------------
# Fixed-shape (jittable) part of the forward.
# ----------------------------------------------------------------------------
@functools.partial(jax.jit, static_argnames=("tile_n",))
def _kernel_var_fixed(words, params, *, tile_n=512):
    B, S, E = words.shape
    w1, b1, w2, b2, w3, b3 = params
    H = w1.shape[1]
    K = w3.shape[1]

    # Split W1 -> W1a (word part) / W1b (context part); never build the [N, 2E] concat.
    w1a, w1b = w1[:E, :], w1[E:, :]

    # Masking / lengths (value-based, as in the PyTorch reference).
    row_sum = words.sum(axis=2)                               # [B, S]
    row_nonzero = jnp.sign(jnp.abs(row_sum))                  # [B, S] in {0, 1}
    lengths = row_nonzero.sum(axis=1)                         # [B]
    safe_len = jnp.where(lengths > 0, lengths, 1.0)           # guard /0 (rows masked out anyway)
    context_b = words.sum(axis=1) / safe_len[:, None]         # [B, E]

    # Tiny per-batch precompute: fold context + b1 into one bias term for layer 1.
    ctx_term = (context_b @ w1b + b1).reshape(B, 1, H)        # [B, 1, H]

    # Adaptive S tiling: multiple of 8, <= tile_n, minimal tail padding.
    S8 = _round_up(S, 8)
    n_tiles = -(-S8 // tile_n)
    tile = _round_up(-(-S8 // n_tiles), 8)
    S_pad = tile * n_tiles
    x = words if S_pad == S else jnp.pad(words, ((0, 0), (0, S_pad - S), (0, 0)))

    out = pl.pallas_call(
        _mlp_kernel,
        out_shape=jax.ShapeDtypeStruct((B, S_pad, K), jnp.float32),
        grid=(B, n_tiles),
        in_specs=[
            pl.BlockSpec((pl.Squeezed(), tile, E), lambda b, s: (b, s, 0)),  # word tile
            pl.BlockSpec((pl.Squeezed(), 1, H), lambda b, s: (b, 0, 0)),     # ctx_term[b]
            pl.BlockSpec((E, H), lambda b, s: (0, 0)),                       # W1a (resident)
            pl.BlockSpec((H, H), lambda b, s: (0, 0)),                       # W2
            pl.BlockSpec((1, H), lambda b, s: (0, 0)),                       # b2
            pl.BlockSpec((H, K), lambda b, s: (0, 0)),                       # W3 (unpadded K)
            pl.BlockSpec((1, K), lambda b, s: (0, 0)),                       # b3
        ],
        out_specs=pl.BlockSpec((pl.Squeezed(), tile, K), lambda b, s: (b, s, 0)),
        compiler_params=pltpu.CompilerParams(
            dimension_semantics=("parallel", "parallel"),
        ),
    )(x, ctx_term, w1a, w2, b2, w3, b3)

    out_all = out[:, :S, :].reshape(-1, K)                    # drop tail padding

    lengths_i = lengths.astype(jnp.int32)
    cums = jnp.cumsum(lengths_i)
    mask_flat = row_nonzero.astype(bool).reshape(-1)
    words_flat = words.reshape(-1, E)
    return out_all, words_flat, mask_flat, cums - lengths_i, cums


def kernel_var_forward(words, params):
    """words: [B, S, E] float32.  Returns (batch_kernel [N, K], words_sel [N, E], s_ix, e_ix)."""
    out_all, words_flat, mask_flat, s_ix, e_ix = _kernel_var_fixed(words, params)
    # masked_select (data-dependent N) done on the small kernel OUTPUT, outside jit.
    batch_kernel = out_all[mask_flat]
    words_sel = words_flat[mask_flat]
    return batch_kernel, words_sel, s_ix, e_ix


# ----------------------------------------------------------------------------
# Pure-JAX reference for correctness check (original concat formulation).
# ----------------------------------------------------------------------------
def mlp_reference(batch_x, params):
    w1, b1, w2, b2, w3, b3 = params
    h1 = jnp.tanh(batch_x @ w1 + b1)
    h2 = jnp.tanh(h1 @ w2 + b2)
    return h2 @ w3 + b3


if __name__ == "__main__":
    embd_dim, hidden_dim, kernel_dim = 32, 32, 16
    B, S = 2, 8

    key = jax.random.PRNGKey(0)
    k_words, k_params = jax.random.split(key)

    words = jax.random.normal(k_words, (B, S, embd_dim), jnp.float32)
    # Zero-pad some set elements so masking is exercised (batch 0 has 6 valid words).
    words = words.at[0, 6:, :].set(0.0)

    params = init_kernel_var_params(k_params, embd_dim, hidden_dim, kernel_dim)

    batch_kernel, words_sel, s_ix, e_ix = kernel_var_forward(words, params)
    batch_kernel = jax.block_until_ready(batch_kernel)
    words_sel = jax.block_until_ready(words_sel)

    # Correctness check against plain-JAX reference.
    B_, S_, E_ = words.shape
    row_nonzero = jnp.sign(jnp.abs(words.sum(2)))
    lengths = row_nonzero.sum(1)
    ctx = jnp.broadcast_to((words.sum(1) / lengths[:, None])[:, None, :], words.shape)
    msk = row_nonzero.astype(bool).reshape(-1)
    batch_x_ref = jnp.concatenate(
        [words.reshape(-1, E_)[msk], ctx.reshape(-1, E_)[msk]], axis=1
    )
    ref = mlp_reference(batch_x_ref, params)

    n_valid = int(lengths.sum())
    assert batch_kernel.shape == (n_valid, kernel_dim)
    assert words_sel.shape == (n_valid, embd_dim)
    assert [int(v) for v in np.asarray(s_ix)] == [0, 6]
    assert [int(v) for v in np.asarray(e_ix)] == [6, 14]
    np.testing.assert_allclose(np.asarray(batch_kernel), np.asarray(ref),
                               rtol=1e-5, atol=1e-5)
    print("KERNEL_OK")
</pallas_src>

<mosaic_0001>
module attributes {stable_mosaic.version = 11 : i64} {
  func.func @_mlp_kernel(%arg0: i32, %arg1: i32, %arg2: memref<1x8x32xf32, #tpu.memory_space<vmem>>, %arg3: memref<1x1x32xf32, #tpu.memory_space<vmem>>, %arg4: memref<32x32xf32, #tpu.memory_space<vmem>>, %arg5: memref<32x32xf32, #tpu.memory_space<vmem>>, %arg6: memref<1x32xf32, #tpu.memory_space<vmem>>, %arg7: memref<32x16xf32, #tpu.memory_space<vmem>>, %arg8: memref<1x16xf32, #tpu.memory_space<vmem>>, %arg9: memref<1x8x16xf32, #tpu.memory_space<vmem>>) attributes {dimension_semantics = [#tpu.dimension_semantics<parallel>, #tpu.dimension_semantics<parallel>], iteration_bounds = array<i64: 2, 1>, scalar_prefetch = 0 : i64, scratch_operands = 0 : i64, tpu.core_type = #tpu.core_type<tc>, window_params = [{transform_indices = @transform_0, window_bounds = array<i64: 1, 8, 32>}, {transform_indices = @transform_1, window_bounds = array<i64: 1, 1, 32>}, {pipeline_mode = #tpu.pipeline_mode<synchronous>, transform_indices = @transform_2, window_bounds = array<i64: 32, 32>}, {pipeline_mode = #tpu.pipeline_mode<synchronous>, transform_indices = @transform_3, window_bounds = array<i64: 32, 32>}, {pipeline_mode = #tpu.pipeline_mode<synchronous>, transform_indices = @transform_4, window_bounds = array<i64: 1, 32>}, {pipeline_mode = #tpu.pipeline_mode<synchronous>, transform_indices = @transform_5, window_bounds = array<i64: 32, 16>}, {pipeline_mode = #tpu.pipeline_mode<synchronous>, transform_indices = @transform_6, window_bounds = array<i64: 1, 16>}, {transform_indices = @transform_7, window_bounds = array<i64: 1, 8, 16>}]} {
    %c0 = arith.constant 0 : index
    %c0_0 = arith.constant 0 : index
    %c0_1 = arith.constant 0 : index
    %0 = vector.load %arg2[%c0, %c0_0, %c0_1] : memref<1x8x32xf32, #tpu.memory_space<vmem>>, vector<1x8x32xf32>
    %1 = vector.shape_cast %0 : vector<1x8x32xf32> to vector<8x32xf32>
    %c0_2 = arith.constant 0 : index
    %c0_3 = arith.constant 0 : index
    %2 = vector.load %arg4[%c0_2, %c0_3] : memref<32x32xf32, #tpu.memory_space<vmem>>, vector<32x32xf32>
    %cst = arith.constant dense<0.000000e+00> : vector<8x32xf32>
    %3 = tpu.matmul %1, %2, %cst {dimension_numbers = #tpu.dot_dimension_numbers<[1], [0], [0], [1], [0, 0, 1, 1], [], []>} : vector<8x32xf32>, vector<32x32xf32>, vector<8x32xf32> -> vector<8x32xf32>
    %c0_4 = arith.constant 0 : index
    %c0_5 = arith.constant 0 : index
    %c0_6 = arith.constant 0 : index
    %4 = vector.load %arg3[%c0_4, %c0_5, %c0_6] : memref<1x1x32xf32, #tpu.memory_space<vmem>>, vector<1x1x32xf32>
    %5 = vector.shape_cast %4 : vector<1x1x32xf32> to vector<1x32xf32>
    %6 = vector.broadcast %5 : vector<1x32xf32> to vector<8x32xf32>
    %7 = arith.addf %3, %6 : vector<8x32xf32>
    %8 = math.tanh %7 : vector<8x32xf32>
    %c0_7 = arith.constant 0 : index
    %c0_8 = arith.constant 0 : index
    %9 = vector.load %arg5[%c0_7, %c0_8] : memref<32x32xf32, #tpu.memory_space<vmem>>, vector<32x32xf32>
    %cst_9 = arith.constant dense<0.000000e+00> : vector<8x32xf32>
    %10 = tpu.matmul %8, %9, %cst_9 {dimension_numbers = #tpu.dot_dimension_numbers<[1], [0], [0], [1], [0, 0, 1, 1], [], []>} : vector<8x32xf32>, vector<32x32xf32>, vector<8x32xf32> -> vector<8x32xf32>
    %c0_10 = arith.constant 0 : index
    %c0_11 = arith.constant 0 : index
    %11 = vector.load %arg6[%c0_10, %c0_11] : memref<1x32xf32, #tpu.memory_space<vmem>>, vector<1x32xf32>
    %12 = vector.broadcast %11 : vector<1x32xf32> to vector<8x32xf32>
    %13 = arith.addf %10, %12 : vector<8x32xf32>
    %14 = math.tanh %13 : vector<8x32xf32>
    %c0_12 = arith.constant 0 : index
    %c0_13 = arith.constant 0 : index
    %15 = vector.load %arg7[%c0_12, %c0_13] : memref<32x16xf32, #tpu.memory_space<vmem>>, vector<32x16xf32>
    %cst_14 = arith.constant dense<0.000000e+00> : vector<8x16xf32>
    %16 = tpu.matmul %14, %15, %cst_14 {dimension_numbers = #tpu.dot_dimension_numbers<[1], [0], [0], [1], [0, 0, 1, 1], [], []>} : vector<8x32xf32>, vector<32x16xf32>, vector<8x16xf32> -> vector<8x16xf32>
    %c0_15 = arith.constant 0 : index
    %c0_16 = arith.constant 0 : index
    %17 = vector.load %arg8[%c0_15, %c0_16] : memref<1x16xf32, #tpu.memory_space<vmem>>, vector<1x16xf32>
    %18 = vector.broadcast %17 : vector<1x16xf32> to vector<8x16xf32>
    %19 = arith.addf %16, %18 : vector<8x16xf32>
    %c0_17 = arith.constant 0 : index
    %c0_18 = arith.constant 0 : index
    %c0_19 = arith.constant 0 : index
    %20 = vector.load %arg9[%c0_17, %c0_18, %c0_19] : memref<1x8x16xf32, #tpu.memory_space<vmem>>, vector<1x8x16xf32>
    %21 = vector.shape_cast %20 : vector<1x8x16xf32> to vector<8x16xf32>
    %22 = vector.shape_cast %19 : vector<8x16xf32> to vector<1x8x16xf32>
    tpu.vector_store %arg9[%c0_17, %c0_18, %c0_19], %22 {strides = array<i32>} : memref<1x8x16xf32, #tpu.memory_space<vmem>>, vector<1x8x16xf32>,
    return
  }
  func.func @transform_0(%arg0: i32, %arg1: i32) -> (i32, i32, i32) {
    %c0_i32 = arith.constant 0 : i32
    %c0_i32_0 = arith.constant 0 : i32
    return %arg0, %arg1, %c0_i32 : i32, i32, i32
  }
  func.func @transform_1(%arg0: i32, %arg1: i32) -> (i32, i32, i32) {
    %c0_i32 = arith.constant 0 : i32
    %c0_i32_0 = arith.constant 0 : i32
    %c0_i32_1 = arith.constant 0 : i32
    return %arg0, %c0_i32, %c0_i32_0 : i32, i32, i32
  }
  func.func @transform_2(%arg0: i32, %arg1: i32) -> (i32, i32) {
    %c0_i32 = arith.constant 0 : i32
    %c0_i32_0 = arith.constant 0 : i32
    %c0_i32_1 = arith.constant 0 : i32
    return %c0_i32, %c0_i32_0 : i32, i32
  }
  func.func @transform_3(%arg0: i32, %arg1: i32) -> (i32, i32) {
    %c0_i32 = arith.constant 0 : i32
    %c0_i32_0 = arith.constant 0 : i32
    %c0_i32_1 = arith.constant 0 : i32
    return %c0_i32, %c0_i32_0 : i32, i32
  }
  func.func @transform_4(%arg0: i32, %arg1: i32) -> (i32, i32) {
    %c0_i32 = arith.constant 0 : i32
    %c0_i32_0 = arith.constant 0 : i32
    %c0_i32_1 = arith.constant 0 : i32
    return %c0_i32, %c0_i32_0 : i32, i32
  }
  func.func @transform_5(%arg0: i32, %arg1: i32) -> (i32, i32) {
    %c0_i32 = arith.constant 0 : i32
    %c0_i32_0 = arith.constant 0 : i32
    %c0_i32_1 = arith.constant 0 : i32
    return %c0_i32, %c0_i32_0 : i32, i32
  }
  func.func @transform_6(%arg0: i32, %arg1: i32) -> (i32, i32) {
    %c0_i32 = arith.constant 0 : i32
    %c0_i32_0 = arith.constant 0 : i32
    %c0_i32_1 = arith.constant 0 : i32
    return %c0_i32, %c0_i32_0 : i32, i32
  }
  func.func @transform_7(%arg0: i32, %arg1: i32) -> (i32, i32, i32) {
    %c0_i32 = arith.constant 0 : i32
    %c0_i32_0 = arith.constant 0 : i32
    return %arg0, %arg1, %c0_i32 : i32, i32, i32
  }
}

</mosaic_0001>

<llo_original>
// kernel: _kernel_var_fixed.1
$region0: #{_kernel_var_fixed.1}
  #allocation0 [shape = 'u32[]', space=smem, size = 0x4, offset = 0x4, fixed_abs, tag = 'smem constant byte address 0x4 - core index']
  #allocation1 [shape = 'u32[72,128]{1,0:T(1,128)}', space=vmem, size = 0x9000, scoped, tag = 'internal scratch']
  %s0 = inlined_call_operand.vmem [shape: f32[2,8,32], index: 0, kind: input, shape index: {}]
  %s1 = inlined_call_operand.vmem [shape: f32[2,1,32], index: 1, kind: input, shape index: {}]
  %s2 = inlined_call_operand.vmem [shape: f32[32,32], index: 2, kind: input, shape index: {}]
  %s3 = inlined_call_operand.vmem [shape: f32[32,32], index: 3, kind: input, shape index: {}]
  %s4 = inlined_call_operand.vmem [shape: f32[1,32], index: 4, kind: input, shape index: {}]
  %s5 = inlined_call_operand.vmem [shape: f32[32,16], index: 5, kind: input, shape index: {}]
  %s6 = inlined_call_operand.vmem [shape: f32[1,16], index: 6, kind: input, shape index: {}]
  %s7 = inlined_call_operand.hbm [shape: f32[2,8,16], index: 7, kind: output, shape index: {}]
  %s8 = sld [smem:[#allocation0]]
  $region61: #{_kernel_var_fixed.1} parent=0
    _
  %s10 = ssub.s32 1, %s8
  %s11 = scalar_select 0, %s10, %s8
  $region1: #{_kernel_var_fixed.1} parent=0
    #allocation2 [shape = 'u8[8192]{0}', space=vmem, size = 0x2000, scoped, tag = 'output window, operand 0']
    #allocation3 [shape = 's32[2]{0}', space=sflag, size = 0x8, scoped, tag = 'scoped memory for _kernel_var_fixed.1']
    %12 = vsyncpa [#allocation3], 0
    %s13 = scalar_lea.sflag [#allocation3], 1
    %14 = vsyncpa %s13, 0
    loop: start=0, step=1, limit=4
    $region2: #{_kernel_var_fixed.1} parent=1 // loop_pre_header
      _
    $region3: #{_kernel_var_fixed.1} parent=1 // loop_header
      %s16 = sphi 0, %s20
      %p17 = scmp.ge.s32.totalorder %s16, 4
      %s23 = sphi 0, %s35
      %s24 = sphi 0, %s31
      %s25 = sphi 0, %s23
      %s26 = sphi 0, %s24
      %s27 = sphi 0, %s25
      %s28 = sphi 0, %s26
      %s40 = sphi 0, %s42
      %s43 = sphi 0, %s40
      %s44 = sphi 0, %s43
      %s60 = sphi 0, %s44
      %s66 = sphi 0, %s68
      %s69 = sphi 0, %s66
      %s70 = sphi 0, %s69
      %s86 = sphi 0, %s70
      %s90 = sphi 0, %s90
      %s92 = sphi 0, %s90
      %s93 = sphi 0, %s92
      %s107 = sphi 0, %s93
      %s111 = sphi 0, %s111
      %s113 = sphi 0, %s111
      %s114 = sphi 0, %s113
      %s128 = sphi 0, %s114
      %s132 = sphi 0, %s132
      %s134 = sphi 0, %s132
      %s135 = sphi 0, %s134
      %s149 = sphi 0, %s135
      %s153 = sphi 0, %s153
      %s155 = sphi 0, %s153
      %s156 = sphi 0, %s155
      %s170 = sphi 0, %s156
      %s174 = sphi 0, %s174
      %s176 = sphi 0, %s174
      %s177 = sphi 0, %s176
      %s191 = sphi 0, %s177
      %s199 = sphi 0, %s201
      %s202 = sphi 0, %s199
      %s203 = sphi 0, %s202
      %s219 = sphi 0, %s203
    $region4: #{_kernel_var_fixed.1} parent=1 // loop_header_branch
      %19 = sbr.rel (%p17) target = $region8
    $region5: #{_kernel_var_fixed.1} parent=1 // loop_body
      %s21 = ssub.s32 %s16, 1
      %s22 = ssub.s32 %s16, 2
      %s29 = sadd.s32 1, %s24
      %p30 = scmp.ge.s32.totalorder %s29, 1
      %s31 = scalar_select %p30, 0, %s29
      %s32 = sadd.s32 1, %s23
      %s33 = scalar_select %p30, %s32, %s23
      %p34 = scmp.ge.s32.totalorder %s33, 2
      %s35 = scalar_select %p34, 0, %s33
      %s36 = ssub.s32 %s23, %s35
      %s37 = ssub.s32 %s24, %s31
      %s38 = sor.u32 %s36, %s37
      %p39 = scmp.eq.s32.totalorder %s38, 0
      %s41 = sadd.s32 %s40, 1
      %s42 = scalar_select %p39, %s40, %s41
      %p45 = pneg %p39
      %p46 = scmp.eq.s32.totalorder %s16, 1
      %p47 = por %p45, %p46
      %p48 = scmp.ne.s32.totalorder %s40, %s43
      %p49 = scmp.eq.s32.totalorder %s16, 0
      %p50 = por %p48, %p49
      %p51 = scmp.ne.s32.totalorder %s40, %s43
      %p52 = scmp.eq.s32.totalorder %s21, 1
      %p53 = por %p51, %p52
      %p54 = scmp.ne.s32.totalorder %s43, %s44
      %p55 = scmp.eq.s32.totalorder %s21, 0
      %p56 = por %p54, %p55
      %p57 = scmp.ne.s32.totalorder %s43, %s44
      %p58 = scmp.eq.s32.totalorder %s22, 1
      %p59 = por %p57, %p58
      %p61 = scmp.ne.s32.totalorder %s44, %s60
      %p62 = scmp.eq.s32.totalorder %s22, 0
      %p63 = por %p61, %p62
      %s64 = ssub.s32 %s23, %s35
      %p65 = scmp.eq.s32.totalorder %s64, 0
      %s67 = sadd.s32 %s66, 1
      %s68 = scalar_select %p65, %s66, %s67
      %p71 = pneg %p65
      %p72 = scmp.eq.s32.totalorder %s16, 1
      %p73 = por %p71, %p72
      %p74 = scmp.ne.s32.totalorder %s66, %s69
      %p75 = scmp.eq.s32.totalorder %s16, 0
      %p76 = por %p74, %p75
      %p77 = scmp.ne.s32.totalorder %s66, %s69
      %p78 = scmp.eq.s32.totalorder %s21, 1
      %p79 = por %p77, %p78
      %p80 = scmp.ne.s32.totalorder %s69, %s70
      %p81 = scmp.eq.s32.totalorder %s21, 0
      %p82 = por %p80, %p81
      %p83 = scmp.ne.s32.totalorder %s69, %s70
      %p84 = scmp.eq.s32.totalorder %s22, 1
      %p85 = por %p83, %p84
      %p87 = scmp.ne.s32.totalorder %s70, %s86
      %p88 = scmp.eq.s32.totalorder %s22, 0
      %p89 = por %p87, %p88
      %s91 = sadd.s32 %s90, 1
      %p94 = scmp.eq.s32.totalorder %s16, 1
      %p95 = scmp.ne.s32.totalorder %s90, %s92
      %p96 = scmp.eq.s32.totalorder %s16, 0
      %p97 = por %p95, %p96
      %p98 = scmp.ne.s32.totalorder %s90, %s92
      %p99 = scmp.eq.s32.totalorder %s21, 1
      %p100 = por %p98, %p99
      %p101 = scmp.ne.s32.totalorder %s92, %s93
      %p102 = scmp.eq.s32.totalorder %s21, 0
      %p103 = por %p101, %p102
      %p104 = scmp.ne.s32.totalorder %s92, %s93
      %p105 = scmp.eq.s32.totalorder %s22, 1
      %p106 = por %p104, %p105
      %p108 = scmp.ne.s32.totalorder %s93, %s107
      %p109 = scmp.eq.s32.totalorder %s22, 0
      %p110 = por %p108, %p109
      %s112 = sadd.s32 %s111, 1
      %p115 = scmp.eq.s32.totalorder %s16, 1
      %p116 = scmp.ne.s32.totalorder %s111, %s113
      %p117 = scmp.eq.s32.totalorder %s16, 0
      %p118 = por %p116, %p117
      %p119 = scmp.ne.s32.totalorder %s111, %s113
      %p120 = scmp.eq.s32.totalorder %s21, 1
      %p121 = por %p119, %p120
      %p122 = scmp.ne.s32.totalorder %s113, %s114
      %p123 = scmp.eq.s32.totalorder %s21, 0
      %p124 = por %p122, %p123
      %p125 = scmp.ne.s32.totalorder %s113, %s114
      %p126 = scmp.eq.s32.totalorder %s22, 1
      %p127 = por %p125, %p126
      %p129 = scmp.ne.s32.totalorder %s114, %s128
      %p130 = scmp.eq.s32.totalorder %s22, 0
      %p131 = por %p129, %p130
      %s133 = sadd.s32 %s132, 1
      %p136 = scmp.eq.s32.totalorder %s16, 1
      %p137 = scmp.ne.s32.totalorder %s132, %s134
      %p138 = scmp.eq.s32.totalorder %s16, 0
      %p139 = por %p137, %p138
      %p140 = scmp.ne.s32.totalorder %s132, %s134
      %p141 = scmp.eq.s32.totalorder %s21, 1
      %p142 = por %p140, %p141
      %p143 = scmp.ne.s32.totalorder %s134, %s135
      %p144 = scmp.eq.s32.totalorder %s21, 0
      %p145 = por %p143, %p144
      %p146 = scmp.ne.s32.totalorder %s134, %s135
      %p147 = scmp.eq.s32.totalorder %s22, 1
      %p148 = por %p146, %p147
      %p150 = scmp.ne.s32.totalorder %s135, %s149
      %p151 = scmp.eq.s32.totalorder %s22, 0
      %p152 = por %p150, %p151
      %s154 = sadd.s32 %s153, 1
      %p157 = scmp.eq.s32.totalorder %s16, 1
      %p158 = scmp.ne.s32.totalorder %s153, %s155
      %p159 = scmp.eq.s32.totalorder %s16, 0
      %p160 = por %p158, %p159
      %p161 = scmp.ne.s32.totalorder %s153, %s155
      %p162 = scmp.eq.s32.totalorder %s21, 1
      %p163 = por %p161, %p162
      %p164 = scmp.ne.s32.totalorder %s155, %s156
      %p165 = scmp.eq.s32.totalorder %s21, 0
      %p166 = por %p164, %p165
      %p167 = scmp.ne.s32.totalorder %s155, %s156
      %p168 = scmp.eq.s32.totalorder %s22, 1
      %p169 = por %p167, %p168
      %p171 = scmp.ne.s32.totalorder %s156, %s170
      %p172 = scmp.eq.s32.totalorder %s22, 0
      %p173 = por %p171, %p172
      %s175 = sadd.s32 %s174, 1
      %p178 = scmp.eq.s32.totalorder %s16, 1
      %p179 = scmp.ne.s32.totalorder %s174, %s176
      %p180 = scmp.eq.s32.totalorder %s16, 0
      %p181 = por %p179, %p180
      %p182 = scmp.ne.s32.totalorder %s174, %s176
      %p183 = scmp.eq.s32.totalorder %s21, 1
      %p184 = por %p182, %p183
      %p185 = scmp.ne.s32.totalorder %s176, %s177
      %p186 = scmp.eq.s32.totalorder %s21, 0
      %p187 = por %p185, %p186
      %p188 = scmp.ne.s32.totalorder %s176, %s177
      %p189 = scmp.eq.s32.totalorder %s22, 1
      %p190 = por %p188, %p189
      %p192 = scmp.ne.s32.totalorder %s177, %s191
      %p193 = scmp.eq.s32.totalorder %s22, 0
      %p194 = por %p192, %p193
      %s195 = ssub.s32 %s23, %s35
      %s196 = ssub.s32 %s24, %s31
      %s197 = sor.u32 %s195, %s196
      %p198 = scmp.eq.s32.totalorder %s197, 0
      %s200 = sadd.s32 %s199, 1
      %s201 = scalar_select %p198, %s199, %s200
      %p204 = pneg %p198
      %p205 = scmp.eq.s32.totalorder %s16, 1
      %p206 = por %p204, %p205
      %p207 = scmp.ne.s32.totalorder %s199, %s202
      %p208 = scmp.eq.s32.totalorder %s16, 0
      %p209 = por %p207, %p208
      %p210 = scmp.ne.s32.totalorder %s199, %s202
      %p211 = scmp.eq.s32.totalorder %s21, 1
      %p212 = por %p210, %p211
      %p213 = scmp.ne.s32.totalorder %s202, %s203
      %p214 = scmp.eq.s32.totalorder %s21, 0
      %p215 = por %p213, %p214
      %p216 = scmp.ne.s32.totalorder %s202, %s203
      %p217 = scmp.eq.s32.totalorder %s22, 1
      %p218 = por %p216, %p217
      %p220 = scmp.ne.s32.totalorder %s203, %s219
      %p221 = scmp.eq.s32.totalorder %s22, 0
      %p222 = por %p220, %p221
      %p223 = scmp.le.s32.totalorder 1, %s16
      %p224 = scmp.lt.s32.totalorder %s16, 3
      %p225 = pnand %p223, %p224
      %p226 = pneg %p225
      // Predicated region
      $region9: #{_kernel_var_fixed.1} parent=5 // pred_check
        _
      $region10: #{_kernel_var_fixed.1} parent=5 // pred_check_branch
        %228 = sbr.rel (%p225) target = $region12
      $region11: #{_kernel_var_fixed.1} parent=5 // pred_region
        %s229 = ssub.s32 %s16, 1
        // Predicated region
        $region13: #{_kernel_var_fixed.1} parent=11 // pred_check
          %p230 = pneg %p103
        $region14: #{_kernel_var_fixed.1} parent=11 // pred_check_branch
          %232 = sbr.rel (%p230) target = $region16
        $region15: #{_kernel_var_fixed.1} parent=11 // pred_region
          _
        $region16: #{_kernel_var_fixed.1} parent=11 // pred_fallthru
          _
        // Predicated region
        $region17: #{_kernel_var_fixed.1} parent=11 // pred_check
          %p233 = pneg %p124
        $region18: #{_kernel_var_fixed.1} parent=11 // pred_check_branch
          %235 = sbr.rel (%p233) target = $region20
        $region19: #{_kernel_var_fixed.1} parent=11 // pred_region
          _
        $region20: #{_kernel_var_fixed.1} parent=11 // pred_fallthru
          _
        // Predicated region
        $region21: #{_kernel_var_fixed.1} parent=11 // pred_check
          %p236 = pneg %p145
        $region22: #{_kernel_var_fixed.1} parent=11 // pred_check_branch
          %238 = sbr.rel (%p236) target = $region24
        $region23: #{_kernel_var_fixed.1} parent=11 // pred_region
          _
        $region24: #{_kernel_var_fixed.1} parent=11 // pred_fallthru
          _
        // Predicated region
        $region25: #{_kernel_var_fixed.1} parent=11 // pred_check
          %p239 = pneg %p166
        $region26: #{_kernel_var_fixed.1} parent=11 // pred_check_branch
          %241 = sbr.rel (%p239) target = $region28
        $region27: #{_kernel_var_fixed.1} parent=11 // pred_region
          _
        $region28: #{_kernel_var_fixed.1} parent=11 // pred_fallthru
          _
        // Predicated region
        $region29: #{_kernel_var_fixed.1} parent=11 // pred_check
          %p242 = pneg %p187
        $region30: #{_kernel_var_fixed.1} parent=11 // pred_check_branch
          %244 = sbr.rel (%p242) target = $region32
        $region31: #{_kernel_var_fixed.1} parent=11 // pred_region
          _
        $region32: #{_kernel_var_fixed.1} parent=11 // pred_fallthru
          _
      $region12: #{_kernel_var_fixed.1} parent=5 // pred_fallthru
        _
      %p245 = scmp.lt.s32.totalorder %s16, 2
      // Predicated region
      $region33: #{_kernel_var_fixed.1} parent=5 // pred_check
        %p246 = pneg %p245
      $region34: #{_kernel_var_fixed.1} parent=5 // pred_check_branch
        %248 = sbr.rel (%p246) target = $region36
      $region35: #{_kernel_var_fixed.1} parent=5 // pred_region
        // Predicated region
        $region37: #{_kernel_var_fixed.1} parent=35 // pred_check
          %p249 = pneg %p50
        $region38: #{_kernel_var_fixed.1} parent=35 // pred_check_branch
          %251 = sbr.rel (%p249) target = $region40
        $region39: #{_kernel_var_fixed.1} parent=35 // pred_region
          %p252 = scmp.lt.s32.totalorder %s23, 1
          %s253 = scalar_select %p252, %s23, 1
          %p254 = scmp.lt.s32.totalorder %s24, 0
          %s255 = scalar_select %p254, %s24, 0
          %s256 = sadd.s32 %s255, %s253
          %s257 = smul.addr %s256, 8
          %s258 = scalar_lea.vmem %s0, %s257
        $region40: #{_kernel_var_fixed.1} parent=35 // pred_fallthru
          _
        // Predicated region
        $region41: #{_kernel_var_fixed.1} parent=35 // pred_check
          %p259 = pneg %p76
        $region42: #{_kernel_var_fixed.1} parent=35 // pred_check_branch
          %261 = sbr.rel (%p259) target = $region44
        $region43: #{_kernel_var_fixed.1} parent=35 // pred_region
          %p262 = scmp.lt.s32.totalorder %s23, 1
          %s263 = scalar_select %p262, %s23, 1
          %s264 = scalar_lea.vmem %s1, %s263
        $region44: #{_kernel_var_fixed.1} parent=35 // pred_fallthru
          _
      $region36: #{_kernel_var_fixed.1} parent=5 // pred_fallthru
        _
      %p265 = scmp.le.s32.totalorder 1, %s16
      %p266 = scmp.lt.s32.totalorder %s16, 3
      %p267 = pnand %p265, %p266
      %p268 = pneg %p267
      // Predicated region
      $region45: #{_kernel_var_fixed.1} parent=5 // pred_check
        _
      $region46: #{_kernel_var_fixed.1} parent=5 // pred_check_branch
        %270 = sbr.rel (%p267) target = $region48
      $region47: #{_kernel_var_fixed.1} parent=5 // pred_region
        %s271 = ssub.s32 %s16, 1
        %p272 = scmp.lt.s32.totalorder %s25, 1
        %s273 = scalar_select %p272, %s25, 1
        %p274 = scmp.lt.s32.totalorder %s26, 0
        %s275 = scalar_select %p274, %s26, 0
        %s276 = sadd.s32 %s275, %s273
        %s277 = smul.addr %s276, 8
        %s278 = scalar_lea.vmem %s0, %s277
        %p279 = pneg %p56
        %p280 = pneg %p53
        %p281 = scmp.lt.s32.totalorder %s25, 1
        %s282 = scalar_select %p281, %s25, 1
        %s283 = scalar_lea.vmem %s1, %s282
        %p284 = pneg %p82
        %p285 = pneg %p79
        %p286 = pneg %p103
        %p287 = pneg %p100
        %p288 = pneg %p124
        %p289 = pneg %p121
        %p290 = pneg %p145
        %p291 = pneg %p142
        %p292 = pneg %p166
        %p293 = pneg %p163
        %p294 = pneg %p187
        %p295 = pneg %p184
        %p296 = pneg %p215
        %p297 = pneg %p212
        %s298 = sand.u32 %s202, 1
        %s299 = scalar_lea.sflag [#allocation3], %s298
        %s300 = sand.u32 %s202, 1
        %s301 = smul.addr %s300, 8
        %s302 = scalar_lea.vmem [#allocation2], %s301
        %p303 = scmp.lt.s32.totalorder %s25, 1
        %s304 = scalar_select %p303, %s25, 1
        %p305 = scmp.lt.s32.totalorder %s26, 0
        %s306 = scalar_select %p305, %s26, 0
        %s307 = sadd.s32 %s306, %s304
        %s308 = smul.addr %s307, 8
        %s309 = scalar_lea.vmem %s0, %s308
        %p310 = scmp.lt.s32.totalorder %s25, 1
        %s311 = scalar_select %p310, %s25, 1
        %s312 = scalar_lea.vmem %s1, %s311
        %v313 = vld [vmem:[%s309] sm:$0xff]
        %v314 = vld [vmem:[%s2] sm:$0xff]
        %v315 = vld [vmem:[%s2 + $0x8] sm:$0xff]
        %v316 = vld [vmem:[%s2 + $0x10] sm:$0xff]
        %v317 = vld [vmem:[%s2 + $0x18] sm:$0xff]
        %v318 = vld [vmem:[%s312] sm:$0x1]
        %v320 = vperm.slane %v318, 0
        %vm322 = vcmask 261120
        %v324 = vsel %vm322, %v313, 0
        %326 = vmatpush.msra.mxu0 0.0
        %327 = vmatpush.msra.mxu0 0.0
        %328 = vmatpush.msra.mxu0 0.0
        %329 = vmatpush.msra.mxu0 0.0
        %330 = vmatpush.msra.mxu0 0.0
        %331 = vmatpush.msra.mxu0 0.0
        %332 = vmatpush.msra.mxu0 0.0
        %333 = vmatpush.msra.mxu0 0.0
        %334 = vmatpush.msra.mxu0 0.0
        %335 = vmatpush.msra.mxu0 0.0
        %336 = vmatpush.msra.mxu0 0.0
        %337 = vmatpush.msra.mxu0 0.0
        %338 = vmatpush.msra.mxu0 %v317
        %339 = vmatpush.msra.mxu0 %v316
        %340 = vmatpush.msra.mxu0 %v315
        %341 = vmatpush.msra.mxu0 %v314
        %342 = vmatmul.f32.gmra.mxu0 %v324
        %v343 = vpop.f32.mrf.mxu0
        %v344 = vadd.f32 %v320, %v343
        %345 = vdwg.mxu0
        %v346 = vtanh.pop %v344
        %v347 = vld [vmem:[%s3] sm:$0xff]
        %v348 = vld [vmem:[%s3 + $0x8] sm:$0xff]
        %v349 = vld [vmem:[%s3 + $0x10] sm:$0xff]
        %v350 = vld [vmem:[%s3 + $0x18] sm:$0xff]
        %v351 = vld [vmem:[%s4] sm:$0x1]
        %v353 = vperm.slane %v351, 0
        %v356 = vsel %vm322, %v346, 0
        %358 = vmatpush.msra.mxu0 0.0
        %359 = vmatpush.msra.mxu0 0.0
        %360 = vmatpush.msra.mxu0 0.0
        %361 = vmatpush.msra.mxu0 0.0
        %362 = vmatpush.msra.mxu0 0.0
        %363 = vmatpush.msra.mxu0 0.0
        %364 = vmatpush.msra.mxu0 0.0
        %365 = vmatpush.msra.mxu0 0.0
        %366 = vmatpush.msra.mxu0 0.0
        %367 = vmatpush.msra.mxu0 0.0
        %368 = vmatpush.msra.mxu0 0.0
        %369 = vmatpush.msra.mxu0 0.0
        %370 = vmatpush.msra.mxu0 %v350
        %371 = vmatpush.msra.mxu0 %v349
        %372 = vmatpush.msra.mxu0 %v348
        %373 = vmatpush.msra.mxu0 %v347
        %374 = vmatmul.f32.gmra.mxu0 %v356
        %v375 = vpop.f32.mrf.mxu0
        %v376 = vadd.f32 %v353, %v375
        %377 = vdwg.mxu0
        %v378 = vtanh.pop %v376
        %v379 = vld [vmem:[%s5] sm:$0xff]
        %v380 = vld [vmem:[%s5 + $0x8] sm:$0xff]
        %v381 = vld [vmem:[%s5 + $0x10] sm:$0xff]
        %v382 = vld [vmem:[%s5 + $0x18] sm:$0xff]
        %v383 = vld [vmem:[%s6] sm:$0x1]
        %v385 = vperm.slane %v383, 0
        %v388 = vsel %vm322, %v378, 0
        %390 = vmatpush.msra.mxu0 0.0
        %391 = vmatpush.msra.mxu0 0.0
        %392 = vmatpush.msra.mxu0 0.0
        %393 = vmatpush.msra.mxu0 0.0
        %394 = vmatpush.msra.mxu0 0.0
        %395 = vmatpush.msra.mxu0 0.0
        %396 = vmatpush.msra.mxu0 0.0
        %397 = vmatpush.msra.mxu0 0.0
        %398 = vmatpush.msra.mxu0 0.0
        %399 = vmatpush.msra.mxu0 0.0
        %400 = vmatpush.msra.mxu0 0.0
        %401 = vmatpush.msra.mxu0 0.0
        %402 = vmatpush.msra.mxu0 %v382
        %403 = vmatpush.msra.mxu0 %v381
        %404 = vmatpush.msra.mxu0 %v380
        %405 = vmatpush.msra.mxu0 %v379
        %406 = vmatmul.f32.gmra.mxu0 %v388
        %v407 = vpop.f32.mrf.mxu0
        %v408 = vadd.f32 %v385, %v407
        %409 = vdwg.mxu0
        %vm410 = vcmask 130048
        %411 = vst.msk [vmem:[%s302] sm:$0xff] %vm410, %v408
        %s412 = sand.u32 %s202, 1
        %s413 = scalar_lea.sflag [#allocation3], %s412
        %s414 = sand.u32 %s202, 1
        %s415 = smul.addr %s414, 8
        %s416 = scalar_lea.vmem [#allocation2], %s415
        // Predicated region
        $region49: #{_kernel_var_fixed.1} parent=47 // pred_check
          %p417 = pneg %p212
        $region50: #{_kernel_var_fixed.1} parent=47 // pred_check_branch
          %419 = sbr.rel (%p417) target = $region52
        $region51: #{_kernel_var_fixed.1} parent=47 // pred_region
          %421 = vsyncadd %s413, 0
          %s422 = sadd.s32 %s26, %s25
          %s423 = smul.addr %s422, 8
          %s424 = scalar_lea.hbm %s7, %s423
          %s426 = sshll.u32 %s416, 4
          %s427 = int_to_ptr.vmem [resolvable:$true] %s426
          %s428 = sshll.u32 %s424, 4
          %s429 = int_to_ptr.hbm [resolvable:$true] %s428
          %431 = dma.vmem_to_hbm [thread:$0]  %s427, 128, %s429, %s413
        $region52: #{_kernel_var_fixed.1} parent=47 // pred_fallthru
          _
      $region48: #{_kernel_var_fixed.1} parent=5 // pred_fallthru
        _
      %p432 = scmp.le.s32.totalorder 2, %s16
      // Predicated region
      $region53: #{_kernel_var_fixed.1} parent=5 // pred_check
        %p433 = pneg %p432
      $region54: #{_kernel_var_fixed.1} parent=5 // pred_check_branch
        %435 = sbr.rel (%p433) target = $region56
      $region55: #{_kernel_var_fixed.1} parent=5 // pred_region
        %s436 = ssub.s32 %s16, 2
        // Predicated region
        $region57: #{_kernel_var_fixed.1} parent=55 // pred_check
          %p437 = pneg %p218
        $region58: #{_kernel_var_fixed.1} parent=55 // pred_check_branch
          %439 = sbr.rel (%p437) target = $region60
        $region59: #{_kernel_var_fixed.1} parent=55 // pred_region
          %s440 = sand.u32 %s203, 1
          %s441 = scalar_lea.sflag [#allocation3], %s440
          %s442 = sand.u32 %s203, 1
          %s443 = smul.addr %s442, 8
          %s444 = scalar_lea.vmem [#allocation2], %s443
          %446 = dma.done %s441, 128
        $region60: #{_kernel_var_fixed.1} parent=55 // pred_fallthru
          _
      $region56: #{_kernel_var_fixed.1} parent=5 // pred_fallthru
        _
    $region6: #{_kernel_var_fixed.1} parent=1 // loop_footer
      %s20 = sadd.s32 1, %s16
    $region7: #{_kernel_var_fixed.1} parent=1 // loop_footer_branch
      %15 = sbr.rel target = $region3
    $region8: #{_kernel_var_fixed.1} parent=1 // loop_exit
      _
    %447 = vsyncpa [#allocation3], 1
    %s448 = scalar_lea.sflag [#allocation3], 1
    %449 = vsyncpa %s448, 1

</llo_original>
